<compile_context>
chip_gen: v7x
topology: tpu7x:2x2x1
jax: 0.10.0
libtpu: 0.0.40
codegen_flags: <defaults>
</compile_context>

<pallas_src>
import jax
import jax.numpy as jnp
from jax.experimental import pallas as pl
from jax.experimental.pallas import tpu as pltpu

_LANE = 128
_SUBLANE = 8
_NEG_BIG = -1e30  # bias for padded class columns -> exp() underflows to 0
_VMEM_BUDGET_BYTES = 12 * 1024 * 1024  # conservative: fits v5e 16 MiB scoped default


def _round_up(x, m):
    return ((x + m - 1) // m) * m


def protonet_kernel(x_ref, w_ref, b_ref, o_ref):
    # x_ref: (tile_b, F)      f32  -- streamed per grid step, unpadded F
    # w_ref: (F, C_pad)       bf16 -- resident (constant index_map)
    # b_ref: (1, C_pad)       f32  -- resident; padded cols = -1e30
    # o_ref: (tile_b, C)      f32  -- unpadded class dim (full last dim)
    x = x_ref[...].astype(jnp.bfloat16)                       # cast hidden under DMA
    logits = jnp.dot(x, w_ref[...],
                     preferred_element_type=jnp.float32)      # MXU, f32 acc
    logits = logits + b_ref[...]

    # Numerically stable softmax over the lane-dense padded class dim.
    m = jnp.max(logits, axis=-1, keepdims=True)
    e = jnp.exp(logits - m)
    denom = jnp.sum(e, axis=-1, keepdims=True)
    probs = e * pl.reciprocal(denom, approx=True)             # EUP vrcp

    # Store only the real classes (small masked vst; HBM writeback stays
    # contiguous and un-amplified).
    o_ref[...] = probs[:, : o_ref.shape[-1]]


def prepare_protonet_params(w, b):
    """Pad + cast parameters once, outside the hot call path.

    w: (F, C) -> (F, C_pad) bf16, zero-padded along classes only.
    b: (C,)   -> (1, C_pad) f32, padded columns set to -1e30 so padded
                 classes contribute ~0 to the softmax denominator.
    """
    F, C = w.shape
    C_pad = _round_up(C, _LANE)
    w_p = jnp.zeros((F, C_pad), jnp.bfloat16)
    w_p = w_p.at[:, :C].set(w.astype(jnp.bfloat16))
    b_p = jnp.full((1, C_pad), _NEG_BIG, jnp.float32)
    b_p = b_p.at[0, :C].set(b.astype(jnp.float32))
    return w_p, b_p


def protonet_forward(x, w_p, b_p, num_classes, *, tile_b=8192):
    """softmax(x @ W + b, axis=1).

    x: (B, F) float; w_p/b_p from prepare_protonet_params.
    Returns (B, num_classes) float32.
    """
    B, F = x.shape
    F_w, C_pad = w_p.shape
    assert F == F_w, "feature dim mismatch between x and prepared weights"
    C = num_classes

    # --- tile_b selection -------------------------------------------------
    # Per-row double-buffered VMEM bytes: f32 x in (F*4*2) + f32 out (C*4*2).
    per_row = 2 * 4 * (F + C)
    vmem_cap_rows = max(_SUBLANE, (_VMEM_BUDGET_BYTES // per_row) // _SUBLANE * _SUBLANE)
    B_align = _round_up(B, _SUBLANE)
    tile_b = max(_SUBLANE, min(_round_up(tile_b, _SUBLANE), vmem_cap_rows, B_align))
    B_pad = _round_up(B, tile_b)

    # Pad the batch dim only if needed (no feature padding, no dtype pass).
    x_in = x.astype(jnp.float32)
    if B_pad != B:
        x_in = jnp.pad(x_in, ((0, B_pad - B), (0, 0)))

    grid = (B_pad // tile_b,)
    out = pl.pallas_call(
        protonet_kernel,
        out_shape=jax.ShapeDtypeStruct((B_pad, C), jnp.float32),
        grid_spec=pltpu.PrefetchScalarGridSpec(
            num_scalar_prefetch=0,
            grid=grid,
            in_specs=[
                pl.BlockSpec((tile_b, F), lambda i: (i, 0)),   # streamed x (full F)
                pl.BlockSpec((F, C_pad), lambda i: (0, 0)),    # resident W
                pl.BlockSpec((1, C_pad), lambda i: (0, 0)),    # resident b
            ],
            out_specs=pl.BlockSpec((tile_b, C), lambda i: (i, 0)),  # unpadded out
        ),
        compiler_params=pltpu.CompilerParams(
            dimension_semantics=("parallel",),
        ),
    )(x_in, w_p, b_p)

    if B_pad != B:
        out = out[:B]
    return out


if __name__ == "__main__":
    # Small shapes consistent with the module: batch=8, feature_dim=32, classes=16.
    batch, feature_dim, num_classes = 8, 32, 16

    key = jax.random.PRNGKey(0)
    kx, kw, kb = jax.random.split(key, 3)

    # Deterministic init mimicking nn.Linear uniform(-1/sqrt(in), 1/sqrt(in)).
    bound = 1.0 / jnp.sqrt(jnp.float32(feature_dim))
    w = jax.random.uniform(kw, (feature_dim, num_classes), jnp.float32, -bound, bound)
    b = jax.random.uniform(kb, (num_classes,), jnp.float32, -bound, bound)
    x = jax.random.normal(kx, (batch, feature_dim), jnp.float32)

    w_p, b_p = prepare_protonet_params(w, b)
    out = protonet_forward(x, w_p, b_p, num_classes)
    out = jax.block_until_ready(out)

    # Reference in plain JAX at matching (bf16-matmul) precision.
    x_bf = x.astype(jnp.bfloat16).astype(jnp.float32)
    w_bf = w.astype(jnp.bfloat16).astype(jnp.float32)
    ref_bf16 = jax.nn.softmax(x_bf @ w_bf + b, axis=1)
    # Full-f32 reference for a looser semantic sanity check.
    ref_f32 = jax.nn.softmax(x @ w + b, axis=1)

    assert out.shape == (batch, num_classes)
    assert jnp.allclose(out, ref_bf16, atol=3e-3, rtol=3e-3)
    assert jnp.allclose(out, ref_f32, atol=2e-2, rtol=2e-2)
    assert jnp.allclose(jnp.sum(out, axis=1), 1.0, atol=3e-3)

    print("KERNEL_OK")
</pallas_src>

<mosaic_0001>
module attributes {stable_mosaic.version = 11 : i64} {
  func.func @protonet_kernel(%arg0: i32, %arg1: memref<8x32xf32, #tpu.memory_space<vmem>>, %arg2: memref<32x128xbf16, #tpu.memory_space<vmem>>, %arg3: memref<1x128xf32, #tpu.memory_space<vmem>>, %arg4: memref<8x16xf32, #tpu.memory_space<vmem>>) attributes {dimension_semantics = [#tpu.dimension_semantics<parallel>], iteration_bounds = array<i64: 1>, scalar_prefetch = 0 : i64, scratch_operands = 0 : i64, tpu.core_type = #tpu.core_type<tc>, window_params = [{transform_indices = @transform_0, window_bounds = array<i64: 8, 32>}, {pipeline_mode = #tpu.pipeline_mode<synchronous>, transform_indices = @transform_1, window_bounds = array<i64: 32, 128>}, {pipeline_mode = #tpu.pipeline_mode<synchronous>, transform_indices = @transform_2, window_bounds = array<i64: 1, 128>}, {transform_indices = @transform_3, window_bounds = array<i64: 8, 16>}]} {
    %c0 = arith.constant 0 : index
    %c0_0 = arith.constant 0 : index
    %0 = vector.load %arg1[%c0, %c0_0] : memref<8x32xf32, #tpu.memory_space<vmem>>, vector<8x32xf32>
    %1 = arith.truncf %0 : vector<8x32xf32> to vector<8x32xbf16>
    %c0_1 = arith.constant 0 : index
    %c0_2 = arith.constant 0 : index
    %2 = vector.load %arg2[%c0_1, %c0_2] : memref<32x128xbf16, #tpu.memory_space<vmem>>, vector<32x128xbf16>
    %cst = arith.constant dense<0.000000e+00> : vector<8x128xf32>
    %3 = tpu.matmul %1, %2, %cst {dimension_numbers = #tpu.dot_dimension_numbers<[1], [0], [0], [1], [0, 0, 1, 1], [], []>} : vector<8x32xbf16>, vector<32x128xbf16>, vector<8x128xf32> -> vector<8x128xf32>
    %c0_3 = arith.constant 0 : index
    %c0_4 = arith.constant 0 : index
    %4 = vector.load %arg3[%c0_3, %c0_4] : memref<1x128xf32, #tpu.memory_space<vmem>>, vector<1x128xf32>
    %5 = vector.broadcast %4 : vector<1x128xf32> to vector<8x128xf32>
    %6 = arith.addf %3, %5 : vector<8x128xf32>
    %cst_5 = arith.constant dense<0xFF800000> : vector<8xf32>
    %7 = vector.multi_reduction <maximumf>, %6, %cst_5 [1] : vector<8x128xf32> to vector<8xf32>
    %8 = vector.shape_cast %7 : vector<8xf32> to vector<8x1xf32>
    %9 = vector.broadcast %8 : vector<8x1xf32> to vector<8x128xf32>
    %10 = arith.subf %6, %9 : vector<8x128xf32>
    %11 = math.exp %10 : vector<8x128xf32>
    %cst_6 = arith.constant dense<0.000000e+00> : vector<8xf32>
    %12 = vector.multi_reduction <add>, %11, %cst_6 [1] : vector<8x128xf32> to vector<8xf32>
    %13 = vector.shape_cast %12 : vector<8xf32> to vector<8x1xf32>
    %14 = tpu.reciprocal %13 {approx = true} : vector<8x1xf32> -> vector<8x1xf32>
    %15 = vector.broadcast %14 : vector<8x1xf32> to vector<8x128xf32>
    %16 = arith.mulf %11, %15 : vector<8x128xf32>
    %17 = vector.extract_strided_slice %16 {offsets = [0, 0], sizes = [8, 16], strides = [1, 1]} : vector<8x128xf32> to vector<8x16xf32>
    %c0_7 = arith.constant 0 : index
    %c0_8 = arith.constant 0 : index
    %18 = vector.load %arg4[%c0_7, %c0_8] : memref<8x16xf32, #tpu.memory_space<vmem>>, vector<8x16xf32>
    tpu.vector_store %arg4[%c0_7, %c0_8], %17 {strides = array<i32>} : memref<8x16xf32, #tpu.memory_space<vmem>>, vector<8x16xf32>,
    return
  }
  func.func @transform_0(%arg0: i32) -> (i32, i32) {
    %c0_i32 = arith.constant 0 : i32
    %c0_i32_0 = arith.constant 0 : i32
    return %arg0, %c0_i32 : i32, i32
  }
  func.func @transform_1(%arg0: i32) -> (i32, i32) {
    %c0_i32 = arith.constant 0 : i32
    %c0_i32_0 = arith.constant 0 : i32
    %c0_i32_1 = arith.constant 0 : i32
    return %c0_i32, %c0_i32_0 : i32, i32
  }
  func.func @transform_2(%arg0: i32) -> (i32, i32) {
    %c0_i32 = arith.constant 0 : i32
    %c0_i32_0 = arith.constant 0 : i32
    %c0_i32_1 = arith.constant 0 : i32
    return %c0_i32, %c0_i32_0 : i32, i32
  }
  func.func @transform_3(%arg0: i32) -> (i32, i32) {
    %c0_i32 = arith.constant 0 : i32
    %c0_i32_0 = arith.constant 0 : i32
    return %arg0, %c0_i32 : i32, i32
  }
}

</mosaic_0001>

<llo_original>
// kernel: tpu_custom_call.1
$region0: #{tpu_custom_call.1}
  #allocation0 [shape = 'u32[]', space=smem, size = 0x4, offset = 0x4, fixed_abs, tag = 'smem constant byte address 0x4 - core index']
  #allocation1 [shape = 'u32[144,128]{1,0:T(1,128)}', space=vmem, size = 0x12000, scoped, tag = 'internal scratch']
  %s0 = inlined_call_operand.hbm [shape: f32[8,32], index: 0, kind: input, shape index: {}]
  %s1 = inlined_call_operand.hbm [shape: bf16[32,128], index: 1, kind: input, shape index: {}]
  %s2 = inlined_call_operand.vmem [shape: f32[1,128], index: 2, kind: input, shape index: {}]
  %s3 = inlined_call_operand.hbm [shape: f32[8,16], index: 3, kind: output, shape index: {}]
  %s4 = sld [smem:[#allocation0]]
  $region30: #{tpu_custom_call.1} parent=0
    _
  %s6 = ssub.s32 1, %s4
  %s7 = scalar_select 0, %s6, %s4
  $region1: #{tpu_custom_call.1} parent=0
    #allocation2 [shape = 'u8[4096]{0}', space=vmem, size = 0x1000, scoped, tag = 'input window, operand 0, single buffered']
    #allocation3 [shape = 's32[1]{0}', space=sflag, size = 0x4, scoped, tag = 'scoped memory for tpu_custom_call.1']
    #allocation4 [shape = 's32[1]{0}', space=sflag, size = 0x4, scoped, tag = 'scoped memory for tpu_custom_call.1']
    #allocation5 [shape = 'u8[8192]{0}', space=vmem, size = 0x2000, scoped, tag = 'input window, operand 1, single buffered']
    #allocation6 [shape = 's32[1]{0}', space=sflag, size = 0x4, scoped, tag = 'scoped memory for tpu_custom_call.1']
    #allocation7 [shape = 'u8[4096]{0}', space=vmem, size = 0x1000, scoped, tag = 'output window, operand 0, single buffered']
    %8 = vsyncpa [#allocation3], 0
    %9 = vsyncpa [#allocation6], 0
    %10 = vsyncpa [#allocation4], 0
    // Predicated region
    $region2: #{tpu_custom_call.1} parent=1 // pred_check
      _
    $region3: #{tpu_custom_call.1} parent=1 // pred_check_branch
      %12 = sbr.rel (0) target = $region5
    $region4: #{tpu_custom_call.1} parent=1 // pred_region
      %s14 = ssub.s32 128, 128
      %15 = vsyncadd [#allocation3], %s14
      %s17 = sshll.u32 [#allocation2], 4
      %s18 = int_to_ptr.vmem [resolvable:$true] %s17
      %20 = dma.hbm_to_vmem [thread:$0]  %s0, 128, %s18, [#allocation3]
    $region5: #{tpu_custom_call.1} parent=1 // pred_fallthru
      _
    // Predicated region
    $region6: #{tpu_custom_call.1} parent=1 // pred_check
      _
    $region7: #{tpu_custom_call.1} parent=1 // pred_check_branch
      %22 = sbr.rel (0) target = $region9
    $region8: #{tpu_custom_call.1} parent=1 // pred_region
      %s24 = ssub.s32 256, 256
      %25 = vsyncadd [#allocation6], %s24
      %s26 = sshll.u32 [#allocation5], 4
      %s27 = int_to_ptr.vmem [resolvable:$true] %s26
      %32 = dma.hbm_to_vmem [thread:$0]  %s1, 256, %s27, [#allocation6], 64, 64, 4
    $region9: #{tpu_custom_call.1} parent=1 // pred_fallthru
      _
    // Predicated region
    $region10: #{tpu_custom_call.1} parent=1 // pred_check
      _
    $region11: #{tpu_custom_call.1} parent=1 // pred_check_branch
      %34 = sbr.rel (0) target = $region13
    $region12: #{tpu_custom_call.1} parent=1 // pred_region
      _
    $region13: #{tpu_custom_call.1} parent=1 // pred_fallthru
      _
    // Predicated region
    $region14: #{tpu_custom_call.1} parent=1 // pred_check
      _
    $region15: #{tpu_custom_call.1} parent=1 // pred_check_branch
      %36 = sbr.rel (0) target = $region17
    $region16: #{tpu_custom_call.1} parent=1 // pred_region
      %37 = dma.done [#allocation3], 128
    $region17: #{tpu_custom_call.1} parent=1 // pred_fallthru
      _
    // Predicated region
    $region18: #{tpu_custom_call.1} parent=1 // pred_check
      _
    $region19: #{tpu_custom_call.1} parent=1 // pred_check_branch
      %39 = sbr.rel (0) target = $region21
    $region20: #{tpu_custom_call.1} parent=1 // pred_region
      %40 = dma.done [#allocation6], 256
    $region21: #{tpu_custom_call.1} parent=1 // pred_fallthru
      _
    %v42 = vld [vmem:[#allocation2] sm:$0xff]
    %v43 = vpack.c.bf16 %v42, %v42
    %v44 = vld [vmem:[#allocation5] sm:$0xf]
    %v45 = vld [vmem:[#allocation5 + $0x4] sm:$0xf]
    %v46 = vld [vmem:[#allocation5 + $0x8] sm:$0xf]
    %v47 = vld [vmem:[#allocation5 + $0xc] sm:$0xf]
    %v48 = vld [vmem:[%s2] sm:$0x1]
    %v50 = vlaneseq
    %v51 = vshrl.u32 %v50, 7
    %v52 = vsub.s32 0, %v51
    %v53 = vrot.slane %v48, %v52
    %v59 = vunpack.c.l.b16 %v44
    %v60 = vunpack.c.l.b16 %v45
    %v61 = vunpack.c.l.b16 %v46
    %v62 = vunpack.c.l.b16 %v47
    %v63 = vpack.c.b16 %v60, %v59
    %v64 = vpack.c.b16 %v62, %v61
    %vm67 = vcmask 261120
    %v69 = vsel %vm67, %v43, 0
    %71 = vmatprep.subr.bf16.mxu0 0
    %72 = vmatpush1.bf16.msra.mxu0 %v63
    %73 = vmatprep.subr.bf16.mxu0 0
    %74 = vmatpush1.bf16.msra.mxu0 %v64
    %75 = vmatprep.subr.bf16.mxu0 0
    %76 = vmatpush1.bf16.msra.mxu0 0
    %77 = vmatprep.subr.bf16.mxu0 0
    %78 = vmatpush1.bf16.msra.mxu0 0
    %79 = vmatprep.subr.bf16.mxu0 0
    %80 = vmatpush1.bf16.msra.mxu0 0
    %81 = vmatprep.subr.bf16.mxu0 0
    %82 = vmatpush1.bf16.msra.mxu0 0
    %83 = vmatprep.subr.bf16.mxu0 0
    %84 = vmatpush1.bf16.msra.mxu0 0
    %85 = vmatprep.subr.bf16.mxu0 0
    %86 = vmatpush1.bf16.msra.mxu0 0
    %87 = vmatprep.subr.bf16.mxu0 0
    %88 = vmatpush1.bf16.msra.mxu0 0
    %89 = vmatprep.subr.bf16.mxu0 0
    %90 = vmatpush1.bf16.msra.mxu0 0
    %91 = vmatprep.subr.bf16.mxu0 0
    %92 = vmatpush1.bf16.msra.mxu0 0
    %93 = vmatprep.subr.bf16.mxu0 0
    %94 = vmatpush1.bf16.msra.mxu0 0
    %95 = vmatprep.subr.bf16.mxu0 0
    %96 = vmatpush1.bf16.msra.mxu0 0
    %97 = vmatprep.subr.bf16.mxu0 0
    %98 = vmatpush1.bf16.msra.mxu0 0
    %99 = vmatprep.subr.bf16.mxu0 0
    %100 = vmatpush1.bf16.msra.mxu0 0
    %101 = vmatprep.subr.bf16.mxu0 0
    %102 = vmatpush1.bf16.msra.mxu0 0
    %103 = vmatprep.mubr.bf16.mxu0 0
    %104 = vmatmul.mubr.bf16.gmra.mrb[0].mxu0 %v69
    %v105 = vpop.f32.mrb[0].mxu0
    %v106 = vadd.f32 %v53, %v105
    %v107 = vpop.f32.mrb[0].mxu0
    %v108 = vpop.f32.mrb[0].mxu0
    %v109 = vpop.f32.mrb[0].mxu0
    %110 = vdwg.mxu0
    %111 = vmax.xlane.f32.xlu0 %v106
    %v112 = vpop.xlane.xlu0 %111
    %v113 = vsub.f32 %v106, %v112
    %v114 = vmul.f32 %v113, 1.442695
    %v115 = vpow.pop %v114
    %116 = vadd.xlane.f32.xlu0 %v115
    %v117 = vpop.xlane.xlu0 %116
    %v118 = vrcp.pop %v117
    %v119 = vmul.f32 %v115, %v118
    %vm120 = vcmask 130048
    %121 = vst.msk [vmem:[#allocation7] sm:$0xff] %vm120, %v119
    // Predicated region
    $region22: #{tpu_custom_call.1} parent=1 // pred_check
      _
    $region23: #{tpu_custom_call.1} parent=1 // pred_check_branch
      %123 = sbr.rel (0) target = $region25
    $region24: #{tpu_custom_call.1} parent=1 // pred_region
      %s125 = ssub.s32 128, 128
      %126 = vsyncadd [#allocation4], %s125
      %s128 = sshll.u32 [#allocation7], 4
      %s129 = int_to_ptr.vmem [resolvable:$true] %s128
      %131 = dma.vmem_to_hbm [thread:$0]  %s129, 128, %s3, [#allocation4]
    $region25: #{tpu_custom_call.1} parent=1 // pred_fallthru
      _
    // Predicated region
    $region26: #{tpu_custom_call.1} parent=1 // pred_check
      _
    $region27: #{tpu_custom_call.1} parent=1 // pred_check_branch
      %133 = sbr.rel (0) target = $region29
    $region28: #{tpu_custom_call.1} parent=1 // pred_region
      %134 = dma.done [#allocation4], 128
    $region29: #{tpu_custom_call.1} parent=1 // pred_fallthru
      _
    %135 = vsyncpa [#allocation3], 1
    %136 = vsyncpa [#allocation6], 1
    %137 = vsyncpa [#allocation4], 1

</llo_original>
